<compile_context>
chip_gen: v7x
topology: tpu7x:2x2x1
jax: 0.10.0
libtpu: 0.0.40
codegen_flags: <defaults>
</compile_context>

<pallas_src>
import functools

import jax
import jax.numpy as jnp
from jax.experimental import pallas as pl
from jax.experimental.pallas import tpu as pltpu


def self_attend_kernel(x_ref, mask_ref, w1_ref, b1_ref, w2_ref, o_ref, *,
                       mxu_dtype, use_mxu_weighted_sum):
    # x_ref:    (Bt, S, E)   current batch tile of seqs
    # mask_ref: (Bt, S)      1.0 = keep, 0.0 = mask (lane-dense, seq axis on lanes)
    # w1_ref:   (E, H); b1_ref: (1, H); w2_ref: (1, H)  (gate weight stored as a row)
    # o_ref:    (Bt, E)
    Bt, S, E = x_ref.shape
    H = w1_ref.shape[1]

    x = x_ref[...]                                    # [Bt, S, E] f32
    x2 = x.reshape(Bt * S, E)                         # S % 8 == 0 -> pure leading-dim merge

    # trans_layer: tanh(x @ W1 + b1), fused over batch*seq on the MXU M dimension.
    if mxu_dtype is None:
        pre = jnp.dot(x2, w1_ref[...],
                      preferred_element_type=jnp.float32,
                      precision=jax.lax.Precision.HIGHEST)
    else:
        pre = jnp.dot(x2.astype(mxu_dtype), w1_ref[...].astype(mxu_dtype),
                      preferred_element_type=jnp.float32)
    t = jnp.tanh(pre + b1_ref[...])                   # [Bt*S, H]
    # TODO(synk): if H grows and the single EUP slot saturates, run tanh in bf16 on v6e/v7x.

    # gate_layer (out_features=1, no bias): VPU multiply + lane reduce over H instead
    # of a degenerate N=1 MXU matmul.
    t3 = t.reshape(Bt, S, H)
    g = jnp.sum(t3 * w2_ref[...], axis=-1)            # [Bt, S], sequence axis on lanes

    # masked_fill(mask == 0, -1e9)
    g = jnp.where(mask_ref[...] < 0.5, jnp.float32(-1000000000.0), g)

    # softmax over the sequence (lane reductions). Exact divide for parity with the
    # reference — the approx reciprocal previously broke the 1e-3 check.
    m = jnp.max(g, axis=-1, keepdims=True)            # [Bt, 1]
    e = jnp.exp(g - m)                                # [Bt, S]
    p = e / jnp.sum(e, axis=-1, keepdims=True)        # [Bt, S]

    if use_mxu_weighted_sum:
        # Large S: batched MXU matmul  o[b,:] = p[b,:] @ x[b,:,:]
        lhs = p[:, None, :]
        rhs = x
        if mxu_dtype is not None:
            lhs = lhs.astype(mxu_dtype)
            rhs = rhs.astype(mxu_dtype)
        acc = jnp.einsum("bqs,bse->bqe", lhs, rhs,
                         preferred_element_type=jnp.float32).reshape(Bt, E)
    else:
        # Small S: broadcast-mul (VPU) + sublane reduce (XLU); avoids M=1 matmuls with
        # <=1/256 MXU row occupancy and keeps the MXU for the W1 matmul.
        acc = jnp.sum(x * p[:, :, None], axis=1)      # [Bt, E]

    o_ref[...] = acc.astype(o_ref.dtype)


def _auto_b_tile(B, S, E, itemsize, target_bytes=2 << 20):
    """~1-4 MiB of seqs per grid step, >=2 steps when possible, sublane-aligned tile."""
    row_bytes = max(1, S * E * itemsize)
    rows = max(1, target_bytes // row_bytes)
    grid_b = max(2, pl.cdiv(B, rows)) if B > 1 else 1    # >=2 steps: keep both v7x TCs busy
    bt = pl.cdiv(B, grid_b)
    bt = ((bt + 7) // 8) * 8                              # 2nd-minor block dim: 8-aligned
    return B if bt >= B else bt


def self_attend(seqs, w1, b1, w2, seq_masks=None, *, b_tile=None,
                mxu_dtype=jnp.bfloat16):
    """seqs: [B,S,E]; w1: [E,H]; b1: [H]; w2: [H,1] or [H]. Returns [B,E]."""
    seqs = jnp.asarray(seqs, jnp.float32)
    B, S, E = seqs.shape
    w1 = jnp.asarray(w1, jnp.float32)
    H = w1.shape[1]

    if seq_masks is None:
        mask = jnp.ones((B, S), dtype=jnp.float32)
    else:
        mask = jnp.asarray(seq_masks, jnp.float32).reshape(B, S)

    b1_row = jnp.asarray(b1, jnp.float32).reshape(1, H)
    w2_row = jnp.asarray(w2, jnp.float32).reshape(1, H)

    # Keep in-kernel reshapes tile-aligned: pad S up to a multiple of 8. Padded
    # positions get mask=0 -> gate=-1e9 -> p=0, so they cannot affect the output.
    if S % 8 != 0:
        Sp = ((S + 7) // 8) * 8
        seqs = jnp.pad(seqs, ((0, 0), (0, Sp - S), (0, 0)))
        mask = jnp.pad(mask, ((0, 0), (0, Sp - S)))
        S = Sp

    itemsize = jnp.dtype(seqs.dtype).itemsize
    if b_tile is None:
        b_tile = _auto_b_tile(B, S, E, itemsize)
    grid_b = pl.cdiv(B, b_tile)
    assert grid_b == 1 or b_tile % 8 == 0, "b_tile must be 8-aligned when tiling the batch"

    # Pad only the ragged batch tail (at most one tile; zero at the defaults here).
    Bp = grid_b * b_tile
    if Bp != B:
        seqs = jnp.pad(seqs, ((0, Bp - B), (0, 0), (0, 0)))
        mask = jnp.pad(mask, ((0, Bp - B), (0, 0)))

    # VMEM budget: double-buffered in/out tiles + resident weights + body temporaries
    # (x copy, t, exp intermediates), with 2x margin; capped at 48 MiB (fits v7x's
    # 64 MiB VMEM; lifts the 16/32 MiB scoped defaults on v5e/v6e).
    tile_in = b_tile * S * (E + 1) * itemsize
    tile_out = b_tile * E * itemsize
    weights = (E * H + 2 * H) * itemsize
    body_tmp = 3 * b_tile * S * (E + H) * 4
    vmem_limit = int(min(48 << 20,
                         max(16 << 20, 2 * (2 * tile_in + 2 * tile_out + 2 * weights + body_tmp))))

    kernel = functools.partial(self_attend_kernel, mxu_dtype=mxu_dtype,
                               use_mxu_weighted_sum=(S > 32))

    out = pl.pallas_call(
        kernel,
        out_shape=jax.ShapeDtypeStruct((Bp, E), seqs.dtype),
        grid=(grid_b,),
        in_specs=[
            pl.BlockSpec((b_tile, S, E), lambda b: (b, 0, 0)),   # seqs tile
            pl.BlockSpec((b_tile, S), lambda b: (b, 0)),         # mask tile (lane-dense)
            # Constant-index weight blocks; tiny here, so default double-buffering is
            # harmless (switch to pl.Buffered(1) / scratch DMA if E*H ever grows large).
            pl.BlockSpec((E, H), lambda b: (0, 0)),
            pl.BlockSpec((1, H), lambda b: (0, 0)),
            pl.BlockSpec((1, H), lambda b: (0, 0)),
        ],
        out_specs=pl.BlockSpec((b_tile, E), lambda b: (b, 0)),
        compiler_params=pltpu.CompilerParams(
            dimension_semantics=("parallel",),      # batch steps shard across v7x's 2 TCs
            vmem_limit_bytes=vmem_limit,
        ),
    )(seqs, mask, w1, b1_row, w2_row)

    return out[:B]


def self_attend_ref(seqs, w1, b1, w2, seq_masks=None):
    """Pure-JAX reference mirroring the PyTorch forward."""
    t = jnp.tanh(jnp.einsum("bse,eh->bsh", seqs, w1) + b1)
    gates = jnp.einsum("bsh,ho->bso", t, jnp.asarray(w2).reshape(-1, 1))[..., 0]   # [B, S]
    if seq_masks is not None:
        gates = jnp.where(seq_masks == 0, -1000000000.0, gates)
    p = jax.nn.softmax(gates, axis=-1)[..., None]     # [B, S, 1]
    return jnp.sum(seqs * p, axis=1)                  # [B, E]


if __name__ == "__main__":
    B, S, E, H = 16, 8, 32, 32

    key = jax.random.PRNGKey(0)
    k_x, k_w1, k_b1, k_w2, k_m = jax.random.split(key, 5)

    seqs = jax.random.normal(k_x, (B, S, E), dtype=jnp.float32)

    # Deterministic parameter init (PyTorch-Linear-style uniform bounds).
    bound1 = 1.0 / (E ** 0.5)
    w1 = jax.random.uniform(k_w1, (E, H), jnp.float32, -bound1, bound1)
    b1 = jax.random.uniform(k_b1, (H,), jnp.float32, -bound1, bound1)
    bound2 = 1.0 / (H ** 0.5)
    w2 = jax.random.uniform(k_w2, (H, 1), jnp.float32, -bound2, bound2)

    # Mask with some zeros to exercise masked_fill; at least one valid position per row.
    seq_masks = (jax.random.uniform(k_m, (B, S)) > 0.25).astype(jnp.float32)
    seq_masks = seq_masks.at[:, 0].set(1.0)

    ref = self_attend_ref(seqs, w1, b1, w2, seq_masks)

    # Exact f32 MXU path: tight check against the reference.
    out_f32 = jax.block_until_ready(self_attend(seqs, w1, b1, w2, seq_masks, mxu_dtype=None))
    assert out_f32.shape == (B, E)
    assert jnp.allclose(out_f32, ref, atol=1e-3, rtol=1e-3), "f32 path mismatch vs reference"

    # Default fast path (bf16 MXU operands, f32 accumulate): bf16-appropriate tolerance.
    out_fast = jax.block_until_ready(self_attend(seqs, w1, b1, w2, seq_masks))
    assert out_fast.shape == (B, E)
    assert jnp.allclose(out_fast, ref, atol=5e-2, rtol=5e-2), "bf16 path mismatch vs reference"

    print("KERNEL_OK")
</pallas_src>

<mosaic_0001>
module attributes {stable_mosaic.version = 11 : i64} {
  func.func @self_attend_kernel(%arg0: i32, %arg1: memref<8x8x32xf32, #tpu.memory_space<vmem>>, %arg2: memref<8x8xf32, #tpu.memory_space<vmem>>, %arg3: memref<32x32xf32, #tpu.memory_space<vmem>>, %arg4: memref<1x32xf32, #tpu.memory_space<vmem>>, %arg5: memref<1x32xf32, #tpu.memory_space<vmem>>, %arg6: memref<8x32xf32, #tpu.memory_space<vmem>>) attributes {dimension_semantics = [#tpu.dimension_semantics<parallel>], iteration_bounds = array<i64: 2>, scalar_prefetch = 0 : i64, scratch_operands = 0 : i64, tpu.core_type = #tpu.core_type<tc>, window_params = [{transform_indices = @transform_0, window_bounds = array<i64: 8, 8, 32>}, {transform_indices = @transform_1, window_bounds = array<i64: 8, 8>}, {pipeline_mode = #tpu.pipeline_mode<synchronous>, transform_indices = @transform_2, window_bounds = array<i64: 32, 32>}, {pipeline_mode = #tpu.pipeline_mode<synchronous>, transform_indices = @transform_3, window_bounds = array<i64: 1, 32>}, {pipeline_mode = #tpu.pipeline_mode<synchronous>, transform_indices = @transform_4, window_bounds = array<i64: 1, 32>}, {transform_indices = @transform_5, window_bounds = array<i64: 8, 32>}]} {
    %c0 = arith.constant 0 : index
    %c0_0 = arith.constant 0 : index
    %c0_1 = arith.constant 0 : index
    %0 = vector.load %arg1[%c0, %c0_0, %c0_1] : memref<8x8x32xf32, #tpu.memory_space<vmem>>, vector<8x8x32xf32>
    %1 = vector.shape_cast %0 : vector<8x8x32xf32> to vector<64x32xf32>
    %c0_2 = arith.constant 0 : index
    %c0_3 = arith.constant 0 : index
    %2 = vector.load %arg3[%c0_2, %c0_3] : memref<32x32xf32, #tpu.memory_space<vmem>>, vector<32x32xf32>
    %cst = arith.constant dense<0.000000e+00> : vector<64x32xf32>
    %3 = tpu.matmul %1, %2, %cst {dimension_numbers = #tpu.dot_dimension_numbers<[1], [0], [0], [1], [0, 0, 1, 1], [], []>, precision = #tpu.contract_precision<fp32>} : vector<64x32xf32>, vector<32x32xf32>, vector<64x32xf32> -> vector<64x32xf32>
    %c0_4 = arith.constant 0 : index
    %c0_5 = arith.constant 0 : index
    %4 = vector.load %arg4[%c0_4, %c0_5] : memref<1x32xf32, #tpu.memory_space<vmem>>, vector<1x32xf32>
    %5 = vector.broadcast %4 : vector<1x32xf32> to vector<64x32xf32>
    %6 = arith.addf %3, %5 : vector<64x32xf32>
    %7 = math.tanh %6 : vector<64x32xf32>
    %8 = vector.shape_cast %7 : vector<64x32xf32> to vector<8x8x32xf32>
    %c0_6 = arith.constant 0 : index
    %c0_7 = arith.constant 0 : index
    %9 = vector.load %arg5[%c0_6, %c0_7] : memref<1x32xf32, #tpu.memory_space<vmem>>, vector<1x32xf32>
    %10 = vector.shape_cast %9 : vector<1x32xf32> to vector<1x1x32xf32>
    %11 = vector.broadcast %10 : vector<1x1x32xf32> to vector<8x8x32xf32>
    %12 = arith.mulf %8, %11 : vector<8x8x32xf32>
    %cst_8 = arith.constant dense<0.000000e+00> : vector<8x8xf32>
    %13 = vector.multi_reduction <add>, %12, %cst_8 [2] : vector<8x8x32xf32> to vector<8x8xf32>
    %c0_9 = arith.constant 0 : index
    %c0_10 = arith.constant 0 : index
    %14 = vector.load %arg2[%c0_9, %c0_10] : memref<8x8xf32, #tpu.memory_space<vmem>>, vector<8x8xf32>
    %cst_11 = arith.constant 5.000000e-01 : f32
    %15 = vector.broadcast %cst_11 : f32 to vector<8x8xf32>
    %16 = arith.cmpf olt, %14, %15 : vector<8x8xf32>
    %cst_12 = arith.constant -1.000000e+09 : f32
    %17 = vector.broadcast %cst_12 : f32 to vector<8x8xf32>
    %18 = arith.select %16, %17, %13 : vector<8x8xi1>, vector<8x8xf32>
    %cst_13 = arith.constant dense<0xFF800000> : vector<8xf32>
    %19 = vector.multi_reduction <maximumf>, %18, %cst_13 [1] : vector<8x8xf32> to vector<8xf32>
    %20 = vector.shape_cast %19 : vector<8xf32> to vector<8x1xf32>
    %21 = vector.broadcast %20 : vector<8x1xf32> to vector<8x8xf32>
    %22 = arith.subf %18, %21 : vector<8x8xf32>
    %23 = math.exp %22 : vector<8x8xf32>
    %cst_14 = arith.constant dense<0.000000e+00> : vector<8xf32>
    %24 = vector.multi_reduction <add>, %23, %cst_14 [1] : vector<8x8xf32> to vector<8xf32>
    %25 = vector.shape_cast %24 : vector<8xf32> to vector<8x1xf32>
    %26 = vector.broadcast %25 : vector<8x1xf32> to vector<8x8xf32>
    %27 = arith.divf %23, %26 : vector<8x8xf32>
    %28 = vector.shape_cast %27 : vector<8x8xf32> to vector<8x8x1xf32>
    %29 = vector.broadcast %28 : vector<8x8x1xf32> to vector<8x8x32xf32>
    %30 = arith.mulf %0, %29 : vector<8x8x32xf32>
    %cst_15 = arith.constant dense<0.000000e+00> : vector<8x32xf32>
    %31 = vector.multi_reduction <add>, %30, %cst_15 [1] : vector<8x8x32xf32> to vector<8x32xf32>
    %c0_16 = arith.constant 0 : index
    %c0_17 = arith.constant 0 : index
    %32 = vector.load %arg6[%c0_16, %c0_17] : memref<8x32xf32, #tpu.memory_space<vmem>>, vector<8x32xf32>
    tpu.vector_store %arg6[%c0_16, %c0_17], %31 {strides = array<i32>} : memref<8x32xf32, #tpu.memory_space<vmem>>, vector<8x32xf32>,
    return
  }
  func.func @transform_0(%arg0: i32) -> (i32, i32, i32) {
    %c0_i32 = arith.constant 0 : i32
    %c0_i32_0 = arith.constant 0 : i32
    %c0_i32_1 = arith.constant 0 : i32
    return %arg0, %c0_i32, %c0_i32_0 : i32, i32, i32
  }
  func.func @transform_1(%arg0: i32) -> (i32, i32) {
    %c0_i32 = arith.constant 0 : i32
    %c0_i32_0 = arith.constant 0 : i32
    return %arg0, %c0_i32 : i32, i32
  }
  func.func @transform_2(%arg0: i32) -> (i32, i32) {
    %c0_i32 = arith.constant 0 : i32
    %c0_i32_0 = arith.constant 0 : i32
    %c0_i32_1 = arith.constant 0 : i32
    return %c0_i32, %c0_i32_0 : i32, i32
  }
  func.func @transform_3(%arg0: i32) -> (i32, i32) {
    %c0_i32 = arith.constant 0 : i32
    %c0_i32_0 = arith.constant 0 : i32
    %c0_i32_1 = arith.constant 0 : i32
    return %c0_i32, %c0_i32_0 : i32, i32
  }
  func.func @transform_4(%arg0: i32) -> (i32, i32) {
    %c0_i32 = arith.constant 0 : i32
    %c0_i32_0 = arith.constant 0 : i32
    %c0_i32_1 = arith.constant 0 : i32
    return %c0_i32, %c0_i32_0 : i32, i32
  }
  func.func @transform_5(%arg0: i32) -> (i32, i32) {
    %c0_i32 = arith.constant 0 : i32
    %c0_i32_0 = arith.constant 0 : i32
    return %arg0, %c0_i32 : i32, i32
  }
}

</mosaic_0001>

<llo_original>
// kernel: tpu_custom_call.1
$region0: #{tpu_custom_call.1}
  #allocation0 [shape = 'u32[]', space=smem, size = 0x4, offset = 0x4, fixed_abs, tag = 'smem constant byte address 0x4 - core index']
  #allocation1 [shape = 'u32[144,128]{1,0:T(1,128)}', space=vmem, size = 0x12000, scoped, tag = 'internal scratch']
  %s0 = inlined_call_operand.hbm [shape: f32[16,8,32], index: 0, kind: input, shape index: {}]
  %s1 = inlined_call_operand.vmem [shape: f32[16,8], index: 1, kind: input, shape index: {}]
  %s2 = inlined_call_operand.hbm [shape: f32[32,32], index: 2, kind: input, shape index: {}]
  %s3 = inlined_call_operand.vmem [shape: f32[1,32], index: 3, kind: input, shape index: {}]
  %s4 = inlined_call_operand.vmem [shape: f32[1,32], index: 4, kind: input, shape index: {}]
  %s5 = inlined_call_operand.hbm [shape: f32[16,32], index: 5, kind: output, shape index: {}]
  %s6 = sld [smem:[#allocation0]]
  $region61: #{tpu_custom_call.1} parent=0
    _
  %s8 = ssub.s32 1, %s6
  %s9 = scalar_select 0, %s8, %s6
  $region1: #{tpu_custom_call.1} parent=0
    #allocation2 [shape = 'u8[65536]{0}', space=vmem, size = 0x10000, scoped, tag = 'input window, operand 0']
    #allocation3 [shape = 's32[2]{0}', space=sflag, size = 0x8, scoped, tag = 'scoped memory for tpu_custom_call.1']
    #allocation4 [shape = 's32[2]{0}', space=sflag, size = 0x8, scoped, tag = 'scoped memory for tpu_custom_call.1']
    #allocation5 [shape = 'u8[16384]{0}', space=vmem, size = 0x4000, scoped, tag = 'input window, operand 2, single buffered']
    #allocation6 [shape = 's32[1]{0}', space=sflag, size = 0x4, scoped, tag = 'scoped memory for tpu_custom_call.1']
    #allocation7 [shape = 'u8[8192]{0}', space=vmem, size = 0x2000, scoped, tag = 'output window, operand 0']
    %10 = vsyncpa [#allocation3], 0
    %s11 = scalar_lea.sflag [#allocation3], 1
    %12 = vsyncpa %s11, 0
    %13 = vsyncpa [#allocation6], 0
    %14 = vsyncpa [#allocation4], 0
    %s15 = scalar_lea.sflag [#allocation4], 1
    %16 = vsyncpa %s15, 0
    loop: start=0, step=1, limit=4
    $region2: #{tpu_custom_call.1} parent=1 // loop_pre_header
      _
    $region3: #{tpu_custom_call.1} parent=1 // loop_header
      %s18 = sphi 0, %s22
      %p19 = scmp.ge.s32.totalorder %s18, 4
      %s28 = sphi 0, %s30
      %s31 = sphi 0, %s28
      %s32 = sphi 0, %s31
      %s48 = sphi 0, %s32
      %s54 = sphi 0, %s56
      %s57 = sphi 0, %s54
      %s58 = sphi 0, %s57
      %s74 = sphi 0, %s58
      %s78 = sphi 0, %s78
      %s80 = sphi 0, %s78
      %s81 = sphi 0, %s80
      %s95 = sphi 0, %s81
      %s99 = sphi 0, %s99
      %s101 = sphi 0, %s99
      %s102 = sphi 0, %s101
      %s116 = sphi 0, %s102
      %s120 = sphi 0, %s120
      %s122 = sphi 0, %s120
      %s123 = sphi 0, %s122
      %s137 = sphi 0, %s123
      %s143 = sphi 0, %s145
      %s146 = sphi 0, %s143
      %s147 = sphi 0, %s146
      %s163 = sphi 0, %s147
    $region4: #{tpu_custom_call.1} parent=1 // loop_header_branch
      %21 = sbr.rel (%p19) target = $region8
    $region5: #{tpu_custom_call.1} parent=1 // loop_body
      %s23 = ssub.s32 %s18, 1
      %s24 = ssub.s32 %s18, 2
      %s25 = sadd.s32 %s18, 1
      %s26 = ssub.s32 %s18, %s25
      %p27 = scmp.eq.s32.totalorder %s26, 0
      %s29 = sadd.s32 %s28, 1
      %s30 = scalar_select %p27, %s28, %s29
      %p33 = pneg %p27
      %p34 = scmp.eq.s32.totalorder %s18, 1
      %p35 = por %p33, %p34
      %p36 = scmp.ne.s32.totalorder %s28, %s31
      %p37 = scmp.eq.s32.totalorder %s18, 0
      %p38 = por %p36, %p37
      %p39 = scmp.ne.s32.totalorder %s28, %s31
      %p40 = scmp.eq.s32.totalorder %s23, 1
      %p41 = por %p39, %p40
      %p42 = scmp.ne.s32.totalorder %s31, %s32
      %p43 = scmp.eq.s32.totalorder %s23, 0
      %p44 = por %p42, %p43
      %p45 = scmp.ne.s32.totalorder %s31, %s32
      %p46 = scmp.eq.s32.totalorder %s24, 1
      %p47 = por %p45, %p46
      %p49 = scmp.ne.s32.totalorder %s32, %s48
      %p50 = scmp.eq.s32.totalorder %s24, 0
      %p51 = por %p49, %p50
      %s52 = ssub.s32 %s18, %s25
      %p53 = scmp.eq.s32.totalorder %s52, 0
      %s55 = sadd.s32 %s54, 1
      %s56 = scalar_select %p53, %s54, %s55
      %p59 = pneg %p53
      %p60 = scmp.eq.s32.totalorder %s18, 1
      %p61 = por %p59, %p60
      %p62 = scmp.ne.s32.totalorder %s54, %s57
      %p63 = scmp.eq.s32.totalorder %s18, 0
      %p64 = por %p62, %p63
      %p65 = scmp.ne.s32.totalorder %s54, %s57
      %p66 = scmp.eq.s32.totalorder %s23, 1
      %p67 = por %p65, %p66
      %p68 = scmp.ne.s32.totalorder %s57, %s58
      %p69 = scmp.eq.s32.totalorder %s23, 0
      %p70 = por %p68, %p69
      %p71 = scmp.ne.s32.totalorder %s57, %s58
      %p72 = scmp.eq.s32.totalorder %s24, 1
      %p73 = por %p71, %p72
      %p75 = scmp.ne.s32.totalorder %s58, %s74
      %p76 = scmp.eq.s32.totalorder %s24, 0
      %p77 = por %p75, %p76
      %s79 = sadd.s32 %s78, 1
      %p82 = scmp.eq.s32.totalorder %s18, 1
      %p83 = scmp.ne.s32.totalorder %s78, %s80
      %p84 = scmp.eq.s32.totalorder %s18, 0
      %p85 = por %p83, %p84
      %p86 = scmp.ne.s32.totalorder %s78, %s80
      %p87 = scmp.eq.s32.totalorder %s23, 1
      %p88 = por %p86, %p87
      %p89 = scmp.ne.s32.totalorder %s80, %s81
      %p90 = scmp.eq.s32.totalorder %s23, 0
      %p91 = por %p89, %p90
      %p92 = scmp.ne.s32.totalorder %s80, %s81
      %p93 = scmp.eq.s32.totalorder %s24, 1
      %p94 = por %p92, %p93
      %p96 = scmp.ne.s32.totalorder %s81, %s95
      %p97 = scmp.eq.s32.totalorder %s24, 0
      %p98 = por %p96, %p97
      %s100 = sadd.s32 %s99, 1
      %p103 = scmp.eq.s32.totalorder %s18, 1
      %p104 = scmp.ne.s32.totalorder %s99, %s101
      %p105 = scmp.eq.s32.totalorder %s18, 0
      %p106 = por %p104, %p105
      %p107 = scmp.ne.s32.totalorder %s99, %s101
      %p108 = scmp.eq.s32.totalorder %s23, 1
      %p109 = por %p107, %p108
      %p110 = scmp.ne.s32.totalorder %s101, %s102
      %p111 = scmp.eq.s32.totalorder %s23, 0
      %p112 = por %p110, %p111
      %p113 = scmp.ne.s32.totalorder %s101, %s102
      %p114 = scmp.eq.s32.totalorder %s24, 1
      %p115 = por %p113, %p114
      %p117 = scmp.ne.s32.totalorder %s102, %s116
      %p118 = scmp.eq.s32.totalorder %s24, 0
      %p119 = por %p117, %p118
      %s121 = sadd.s32 %s120, 1
      %p124 = scmp.eq.s32.totalorder %s18, 1
      %p125 = scmp.ne.s32.totalorder %s120, %s122
      %p126 = scmp.eq.s32.totalorder %s18, 0
      %p127 = por %p125, %p126
      %p128 = scmp.ne.s32.totalorder %s120, %s122
      %p129 = scmp.eq.s32.totalorder %s23, 1
      %p130 = por %p128, %p129
      %p131 = scmp.ne.s32.totalorder %s122, %s123
      %p132 = scmp.eq.s32.totalorder %s23, 0
      %p133 = por %p131, %p132
      %p134 = scmp.ne.s32.totalorder %s122, %s123
      %p135 = scmp.eq.s32.totalorder %s24, 1
      %p136 = por %p134, %p135
      %p138 = scmp.ne.s32.totalorder %s123, %s137
      %p139 = scmp.eq.s32.totalorder %s24, 0
      %p140 = por %p138, %p139
      %s141 = ssub.s32 %s18, %s25
      %p142 = scmp.eq.s32.totalorder %s141, 0
      %s144 = sadd.s32 %s143, 1
      %s145 = scalar_select %p142, %s143, %s144
      %p148 = pneg %p142
      %p149 = scmp.eq.s32.totalorder %s18, 1
      %p150 = por %p148, %p149
      %p151 = scmp.ne.s32.totalorder %s143, %s146
      %p152 = scmp.eq.s32.totalorder %s18, 0
      %p153 = por %p151, %p152
      %p154 = scmp.ne.s32.totalorder %s143, %s146
      %p155 = scmp.eq.s32.totalorder %s23, 1
      %p156 = por %p154, %p155
      %p157 = scmp.ne.s32.totalorder %s146, %s147
      %p158 = scmp.eq.s32.totalorder %s23, 0
      %p159 = por %p157, %p158
      %p160 = scmp.ne.s32.totalorder %s146, %s147
      %p161 = scmp.eq.s32.totalorder %s24, 1
      %p162 = por %p160, %p161
      %p164 = scmp.ne.s32.totalorder %s147, %s163
      %p165 = scmp.eq.s32.totalorder %s24, 0
      %p166 = por %p164, %p165
      %p167 = scmp.le.s32.totalorder 1, %s18
      %p168 = scmp.lt.s32.totalorder %s18, 3
      %p169 = pnand %p167, %p168
      %p170 = pneg %p169
      // Predicated region
      $region9: #{tpu_custom_call.1} parent=5 // pred_check
        _
      $region10: #{tpu_custom_call.1} parent=5 // pred_check_branch
        %172 = sbr.rel (%p169) target = $region12
      $region11: #{tpu_custom_call.1} parent=5 // pred_region
        %s173 = ssub.s32 %s18, 1
        // Predicated region
        $region13: #{tpu_custom_call.1} parent=11 // pred_check
          %p174 = pneg %p91
        $region14: #{tpu_custom_call.1} parent=11 // pred_check_branch
          %176 = sbr.rel (%p174) target = $region16
        $region15: #{tpu_custom_call.1} parent=11 // pred_region
          %s178 = ssub.s32 512, 512
          %179 = vsyncadd [#allocation6], %s178
          %s180 = sshll.u32 [#allocation5], 4
          %s181 = int_to_ptr.vmem [resolvable:$true] %s180
          %186 = dma.hbm_to_vmem [thread:$0]  %s2, 512, %s181, [#allocation6], 128, 128, 8
        $region16: #{tpu_custom_call.1} parent=11 // pred_fallthru
          _
        // Predicated region
        $region17: #{tpu_custom_call.1} parent=11 // pred_check
          %p187 = pneg %p112
        $region18: #{tpu_custom_call.1} parent=11 // pred_check_branch
          %189 = sbr.rel (%p187) target = $region20
        $region19: #{tpu_custom_call.1} parent=11 // pred_region
          _
        $region20: #{tpu_custom_call.1} parent=11 // pred_fallthru
          _
        // Predicated region
        $region21: #{tpu_custom_call.1} parent=11 // pred_check
          %p190 = pneg %p133
        $region22: #{tpu_custom_call.1} parent=11 // pred_check_branch
          %192 = sbr.rel (%p190) target = $region24
        $region23: #{tpu_custom_call.1} parent=11 // pred_region
          _
        $region24: #{tpu_custom_call.1} parent=11 // pred_fallthru
          _
      $region12: #{tpu_custom_call.1} parent=5 // pred_fallthru
        _
      %p193 = scmp.lt.s32.totalorder %s18, 2
      // Predicated region
      $region25: #{tpu_custom_call.1} parent=5 // pred_check
        %p194 = pneg %p193
      $region26: #{tpu_custom_call.1} parent=5 // pred_check_branch
        %196 = sbr.rel (%p194) target = $region28
      $region27: #{tpu_custom_call.1} parent=5 // pred_region
        // Predicated region
        $region29: #{tpu_custom_call.1} parent=27 // pred_check
          %p197 = pneg %p38
        $region30: #{tpu_custom_call.1} parent=27 // pred_check_branch
          %199 = sbr.rel (%p197) target = $region32
        $region31: #{tpu_custom_call.1} parent=27 // pred_region
          %s200 = sand.u32 %s28, 1
          %s201 = scalar_lea.sflag [#allocation3], %s200
          %s202 = sand.u32 %s28, 1
          %s203 = smul.addr %s202, 64
          %s204 = scalar_lea.vmem [#allocation2], %s203
          %s205 = smul.u32 8, %s18
          %s207 = ssub.s32 1024, 1024
          %208 = vsyncadd %s201, %s207
          %s209 = smul.addr %s205, 128
          %s210 = scalar_lea.hbm %s0, %s209
          %s211 = sshll.u32 %s204, 4
          %s212 = int_to_ptr.vmem [resolvable:$true] %s211
          %217 = dma.hbm_to_vmem [thread:$0]  %s210, 1024, %s212, %s201, 128, 128, 8
        $region32: #{tpu_custom_call.1} parent=27 // pred_fallthru
          _
        // Predicated region
        $region33: #{tpu_custom_call.1} parent=27 // pred_check
          %p218 = pneg %p64
        $region34: #{tpu_custom_call.1} parent=27 // pred_check_branch
          %220 = sbr.rel (%p218) target = $region36
        $region35: #{tpu_custom_call.1} parent=27 // pred_region
          %p221 = scmp.lt.s32.totalorder %s18, 1
          %s222 = scalar_select %p221, %s18, 1
          %s223 = smul.addr %s222, 8
          %s224 = scalar_lea.vmem %s1, %s223
        $region36: #{tpu_custom_call.1} parent=27 // pred_fallthru
          _
      $region28: #{tpu_custom_call.1} parent=5 // pred_fallthru
        _
      %p225 = scmp.le.s32.totalorder 1, %s18
      %p226 = scmp.lt.s32.totalorder %s18, 3
      %p227 = pnand %p225, %p226
      %p228 = pneg %p227
      // Predicated region
      $region37: #{tpu_custom_call.1} parent=5 // pred_check
        _
      $region38: #{tpu_custom_call.1} parent=5 // pred_check_branch
        %230 = sbr.rel (%p227) target = $region40
      $region39: #{tpu_custom_call.1} parent=5 // pred_region
        %s231 = ssub.s32 %s18, 1
        %s232 = sand.u32 %s31, 1
        %s233 = scalar_lea.sflag [#allocation3], %s232
        %s234 = sand.u32 %s31, 1
        %s235 = smul.addr %s234, 64
        %s236 = scalar_lea.vmem [#allocation2], %s235
        // Predicated region
        $region41: #{tpu_custom_call.1} parent=39 // pred_check
          %p237 = pneg %p44
        $region42: #{tpu_custom_call.1} parent=39 // pred_check_branch
          %239 = sbr.rel (%p237) target = $region44
        $region43: #{tpu_custom_call.1} parent=39 // pred_region
          %240 = dma.done %s233, 1024
        $region44: #{tpu_custom_call.1} parent=39 // pred_fallthru
          _
        // Predicated region
        $region45: #{tpu_custom_call.1} parent=39 // pred_check
          %p241 = pneg %p91
        $region46: #{tpu_custom_call.1} parent=39 // pred_check_branch
          %243 = sbr.rel (%p241) target = $region48
        $region47: #{tpu_custom_call.1} parent=39 // pred_region
          %244 = dma.done [#allocation6], 512
        $region48: #{tpu_custom_call.1} parent=39 // pred_fallthru
          _
        %s245 = sand.u32 %s31, 1
        %s246 = scalar_lea.sflag [#allocation3], %s245
        %s247 = sand.u32 %s31, 1
        %s248 = smul.addr %s247, 64
        %s249 = scalar_lea.vmem [#allocation2], %s248
        %p250 = pneg %p44
        %p251 = pneg %p41
        %p252 = scmp.lt.s32.totalorder %s23, 1
        %s253 = scalar_select %p252, %s23, 1
        %s254 = smul.addr %s253, 8
        %s255 = scalar_lea.vmem %s1, %s254
        %p256 = pneg %p70
        %p257 = pneg %p67
        %p258 = pneg %p91
        %p259 = pneg %p88
        %p260 = pneg %p112
        %p261 = pneg %p109
        %p262 = pneg %p133
        %p263 = pneg %p130
        %p264 = pneg %p159
        %p265 = pneg %p156
        %s266 = sand.u32 %s146, 1
        %s267 = scalar_lea.sflag [#allocation4], %s266
        %s268 = sand.u32 %s146, 1
        %s269 = smul.addr %s268, 8
        %s270 = scalar_lea.vmem [#allocation7], %s269
        %s271 = smul.u32 8, %s23
        %p272 = scmp.lt.s32.totalorder %s23, 1
        %s273 = scalar_select %p272, %s23, 1
        %s274 = smul.addr %s273, 8
        %s275 = scalar_lea.vmem %s1, %s274
        %v276 = vld [vmem:[%s236] sm:$0xff]
        %v277 = vld [vmem:[%s236 + $0x8] sm:$0xff]
        %v278 = vld [vmem:[%s236 + $0x10] sm:$0xff]
        %v279 = vld [vmem:[%s236 + $0x18] sm:$0xff]
        %v280 = vld [vmem:[%s236 + $0x20] sm:$0xff]
        %v281 = vld [vmem:[%s236 + $0x28] sm:$0xff]
        %v282 = vld [vmem:[%s236 + $0x30] sm:$0xff]
        %v283 = vld [vmem:[%s236 + $0x38] sm:$0xff]
        %v284 = vld [vmem:[#allocation5] sm:$0xff]
        %v285 = vld [vmem:[#allocation5 + $0x8] sm:$0xff]
        %v286 = vld [vmem:[#allocation5 + $0x10] sm:$0xff]
        %v287 = vld [vmem:[#allocation5 + $0x18] sm:$0xff]
        %v288 = vld [vmem:[%s3] sm:$0x1]
        %v290 = vlaneseq
        %v291 = vshrl.u32 %v290, 7
        %v292 = vsub.s32 0, %v291
        %v293 = vrot.slane %v288, %v292
        %vm295 = vcmask 261120
        %v297 = vsel %vm295, %v276, 0
        %v300 = vsel %vm295, %v277, 0
        %v303 = vsel %vm295, %v278, 0
        %v306 = vsel %vm295, %v279, 0
        %v309 = vsel %vm295, %v280, 0
        %v312 = vsel %vm295, %v281, 0
        %v315 = vsel %vm295, %v282, 0
        %v318 = vsel %vm295, %v283, 0
        %320 = vmatprep.subr.mxu0 0.0
        %v321 = vand.u32 %v284, 4294901760
        %322 = vmatpush1.msra.mxu0 %v321
        %323 = vmatprep.subr.mxu0 0.0
        %v324 = vand.u32 %v285, 4294901760
        %325 = vmatpush1.msra.mxu0 %v324
        %326 = vmatprep.subr.mxu0 0.0
        %v327 = vand.u32 %v286, 4294901760
        %328 = vmatpush1.msra.mxu0 %v327
        %329 = vmatprep.subr.mxu0 0.0
        %v330 = vand.u32 %v287, 4294901760
        %331 = vmatpush1.msra.mxu0 %v330
        %332 = vmatprep.subr.mxu0 0.0
        %333 = vmatpush1.msra.mxu0 0.0
        %334 = vmatprep.subr.mxu0 0.0
        %335 = vmatpush1.msra.mxu0 0.0
        %336 = vmatprep.subr.mxu0 0.0
        %337 = vmatpush1.msra.mxu0 0.0
        %338 = vmatprep.subr.mxu0 0.0
        %339 = vmatpush1.msra.mxu0 0.0
        %340 = vmatprep.subr.mxu0 0.0
        %341 = vmatpush1.msra.mxu0 0.0
        %342 = vmatprep.subr.mxu0 0.0
        %343 = vmatpush1.msra.mxu0 0.0
        %344 = vmatprep.subr.mxu0 0.0
        %345 = vmatpush1.msra.mxu0 0.0
        %346 = vmatprep.subr.mxu0 0.0
        %347 = vmatpush1.msra.mxu0 0.0
        %348 = vmatprep.subr.mxu0 0.0
        %349 = vmatpush1.msra.mxu0 0.0
        %350 = vmatprep.subr.mxu0 0.0
        %351 = vmatpush1.msra.mxu0 0.0
        %352 = vmatprep.subr.mxu0 0.0
        %353 = vmatpush1.msra.mxu0 0.0
        %354 = vmatprep.subr.mxu0 0.0
        %355 = vmatpush1.msra.mxu0 0.0
        %356 = vmatprep.subr.mxu0 0.0
        %357 = vmatpush1.msra.mxu0 0.0
        %358 = vmatprep.subr.mxu0 0.0
        %359 = vmatpush1.msra.mxu0 0.0
        %360 = vmatprep.subr.mxu0 0.0
        %361 = vmatpush1.msra.mxu0 0.0
        %362 = vmatprep.subr.mxu0 0.0
        %363 = vmatpush1.msra.mxu0 0.0
        %364 = vmatprep.subr.mxu0 0.0
        %365 = vmatpush1.msra.mxu0 0.0
        %366 = vmatprep.subr.mxu0 0.0
        %367 = vmatpush1.msra.mxu0 0.0
        %368 = vmatprep.subr.mxu0 0.0
        %369 = vmatpush1.msra.mxu0 0.0
        %370 = vmatprep.subr.mxu0 0.0
        %371 = vmatpush1.msra.mxu0 0.0
        %372 = vmatprep.subr.mxu0 0.0
        %373 = vmatpush1.msra.mxu0 0.0
        %374 = vmatprep.subr.mxu0 0.0
        %375 = vmatpush1.msra.mxu0 0.0
        %376 = vmatprep.subr.mxu0 0.0
        %377 = vmatpush1.msra.mxu0 0.0
        %378 = vmatprep.subr.mxu0 0.0
        %379 = vmatpush1.msra.mxu0 0.0
        %380 = vmatprep.subr.mxu0 0.0
        %381 = vmatpush1.msra.mxu0 0.0
        %382 = vmatprep.subr.mxu0 0.0
        %383 = vmatpush1.msra.mxu0 0.0
        %384 = vmatprep.subr.mxu0 0.0
        %385 = vmatpush1.msra.mxu0 0.0
        %386 = vmatprep.subr.mxu0 0.0
        %387 = vmatpush1.msra.mxu0 0.0
        %388 = vmatprep.mubr.f32.mxu0 0.0
        %v389 = vand.u32 %v297, 4294901760
        %v390 = vsub.f32 %v297, %v389
        %v391 = vand.u32 %v390, 4294901760
        %v392 = vsub.f32 %v390, %v391
        %v393 = vand.u32 %v392, 4294901760
        %394 = vmatmul.mubr.f32.gmra.mrb[0].mxu0 %v393
        %v395 = vpop.f32.mrb[0].mxu0
        %v396 = vadd.f32 %v293, %v395
        %v397 = vpop.f32.mrb[0].mxu0
        %398 = vmatprep.mubr.f32.mxu0 0.0
        %v399 = vand.u32 %v300, 4294901760
        %v400 = vsub.f32 %v300, %v399
        %v401 = vand.u32 %v400, 4294901760
        %v402 = vsub.f32 %v400, %v401
        %v403 = vand.u32 %v402, 4294901760
        %404 = vmatmul.mubr.f32.gmra.mrb[0].mxu0 %v403
        %v405 = vpop.f32.mrb[0].mxu0
        %v406 = vadd.f32 %v293, %v405
        %v407 = vpop.f32.mrb[0].mxu0
        %408 = vmatprep.mubr.f32.mxu0 0.0
        %v409 = vand.u32 %v303, 4294901760
        %v410 = vsub.f32 %v303, %v409
        %v411 = vand.u32 %v410, 4294901760
        %v412 = vsub.f32 %v410, %v411
        %v413 = vand.u32 %v412, 4294901760
        %414 = vmatmul.mubr.f32.gmra.mrb[0].mxu0 %v413
        %v415 = vpop.f32.mrb[0].mxu0
        %v416 = vadd.f32 %v293, %v415
        %v417 = vpop.f32.mrb[0].mxu0
        %418 = vmatprep.mubr.f32.mxu0 0.0
        %v419 = vand.u32 %v306, 4294901760
        %v420 = vsub.f32 %v306, %v419
        %v421 = vand.u32 %v420, 4294901760
        %v422 = vsub.f32 %v420, %v421
        %v423 = vand.u32 %v422, 4294901760
        %424 = vmatmul.mubr.f32.gmra.mrb[0].mxu0 %v423
        %v425 = vpop.f32.mrb[0].mxu0
        %v426 = vadd.f32 %v293, %v425
        %v427 = vpop.f32.mrb[0].mxu0
        %428 = vmatprep.mubr.f32.mxu0 0.0
        %v429 = vand.u32 %v309, 4294901760
        %v430 = vsub.f32 %v309, %v429
        %v431 = vand.u32 %v430, 4294901760
        %v432 = vsub.f32 %v430, %v431
        %v433 = vand.u32 %v432, 4294901760
        %434 = vmatmul.mubr.f32.gmra.mrb[0].mxu0 %v433
        %v435 = vpop.f32.mrb[0].mxu0
        %v436 = vadd.f32 %v293, %v435
        %v437 = vpop.f32.mrb[0].mxu0
        %438 = vmatprep.mubr.f32.mxu0 0.0
        %v439 = vand.u32 %v312, 4294901760
        %v440 = vsub.f32 %v312, %v439
        %v441 = vand.u32 %v440, 4294901760
        %v442 = vsub.f32 %v440, %v441
        %v443 = vand.u32 %v442, 4294901760
        %444 = vmatmul.mubr.f32.gmra.mrb[0].mxu0 %v443
        %v445 = vpop.f32.mrb[0].mxu0
        %v446 = vadd.f32 %v293, %v445
        %v447 = vpop.f32.mrb[0].mxu0
        %448 = vmatprep.mubr.f32.mxu0 0.0
        %v449 = vand.u32 %v315, 4294901760
        %v450 = vsub.f32 %v315, %v449
        %v451 = vand.u32 %v450, 4294901760
        %v452 = vsub.f32 %v450, %v451
        %v453 = vand.u32 %v452, 4294901760
        %454 = vmatmul.mubr.f32.gmra.mrb[0].mxu0 %v453
        %v455 = vpop.f32.mrb[0].mxu0
        %v456 = vadd.f32 %v293, %v455
        %v457 = vpop.f32.mrb[0].mxu0
        %458 = vmatprep.mubr.f32.mxu0 0.0
        %v459 = vand.u32 %v318, 4294901760
        %v460 = vsub.f32 %v318, %v459
        %v461 = vand.u32 %v460, 4294901760
        %v462 = vsub.f32 %v460, %v461
        %v463 = vand.u32 %v462, 4294901760
        %464 = vmatmul.mubr.f32.gmra.mrb[0].mxu0 %v463
        %v465 = vpop.f32.mrb[0].mxu0
        %v466 = vadd.f32 %v293, %v465
        %v467 = vpop.f32.mrb[0].mxu0
        %468 = vdwg.mxu0
        %469 = vmatprep.subr.mxu0 0.0
        %v470 = vand.u32 %v284, 4294901760
        %v471 = vsub.f32 %v284, %v470
        %v472 = vand.u32 %v471, 4294901760
        %v473 = vsub.f32 %v471, %v472
        %v474 = vand.u32 %v473, 4294901760
        %475 = vmatpush1.msra.mxu0 %v474
        %476 = vmatprep.subr.mxu0 0.0
        %v477 = vand.u32 %v285, 4294901760
        %v478 = vsub.f32 %v285, %v477
        %v479 = vand.u32 %v478, 4294901760
        %v480 = vsub.f32 %v478, %v479
        %v481 = vand.u32 %v480, 4294901760
        %482 = vmatpush1.msra.mxu0 %v481
        %483 = vmatprep.subr.mxu0 0.0
        %v484 = vand.u32 %v286, 4294901760
        %v485 = vsub.f32 %v286, %v484
        %v486 = vand.u32 %v485, 4294901760
        %v487 = vsub.f32 %v485, %v486
        %v488 = vand.u32 %v487, 4294901760
        %489 = vmatpush1.msra.mxu0 %v488
        %490 = vmatprep.subr.mxu0 0.0
        %v491 = vand.u32 %v287, 4294901760
        %v492 = vsub.f32 %v287, %v491
        %v493 = vand.u32 %v492, 4294901760
        %v494 = vsub.f32 %v492, %v493
        %v495 = vand.u32 %v494, 4294901760
        %496 = vmatpush1.msra.mxu0 %v495
        %497 = vmatprep.subr.mxu0 0.0
        %498 = vmatpush1.msra.mxu0 0.0
        %499 = vmatprep.subr.mxu0 0.0
        %500 = vmatpush1.msra.mxu0 0.0
        %501 = vmatprep.subr.mxu0 0.0
        %502 = vmatpush1.msra.mxu0 0.0
        %503 = vmatprep.subr.mxu0 0.0
        %504 = vmatpush1.msra.mxu0 0.0
        %505 = vmatprep.subr.mxu0 0.0
        %506 = vmatpush1.msra.mxu0 0.0
        %507 = vmatprep.subr.mxu0 0.0
        %508 = vmatpush1.msra.mxu0 0.0
        %509 = vmatprep.subr.mxu0 0.0
        %510 = vmatpush1.msra.mxu0 0.0
        %511 = vmatprep.subr.mxu0 0.0
        %512 = vmatpush1.msra.mxu0 0.0
        %513 = vmatprep.subr.mxu0 0.0
        %514 = vmatpush1.msra.mxu0 0.0
        %515 = vmatprep.subr.mxu0 0.0
        %516 = vmatpush1.msra.mxu0 0.0
        %517 = vmatprep.subr.mxu0 0.0
        %518 = vmatpush1.msra.mxu0 0.0
        %519 = vmatprep.subr.mxu0 0.0
        %520 = vmatpush1.msra.mxu0 0.0
        %521 = vmatprep.subr.mxu0 0.0
        %522 = vmatpush1.msra.mxu0 0.0
        %523 = vmatprep.subr.mxu0 0.0
        %524 = vmatpush1.msra.mxu0 0.0
        %525 = vmatprep.subr.mxu0 0.0
        %526 = vmatpush1.msra.mxu0 0.0
        %527 = vmatprep.subr.mxu0 0.0
        %528 = vmatpush1.msra.mxu0 0.0
        %529 = vmatprep.subr.mxu0 0.0
        %530 = vmatpush1.msra.mxu0 0.0
        %531 = vmatprep.subr.mxu0 0.0
        %532 = vmatpush1.msra.mxu0 0.0
        %533 = vmatprep.subr.mxu0 0.0
        %534 = vmatpush1.msra.mxu0 0.0
        %535 = vmatprep.subr.mxu0 0.0
        %536 = vmatpush1.msra.mxu0 0.0
        %537 = vmatprep.subr.mxu0 0.0
        %538 = vmatpush1.msra.mxu0 0.0
        %539 = vmatprep.subr.mxu0 0.0
        %540 = vmatpush1.msra.mxu0 0.0
        %541 = vmatprep.subr.mxu0 0.0
        %542 = vmatpush1.msra.mxu0 0.0
        %543 = vmatprep.subr.mxu0 0.0
        %544 = vmatpush1.msra.mxu0 0.0
        %545 = vmatprep.subr.mxu0 0.0
        %546 = vmatpush1.msra.mxu0 0.0
        %547 = vmatprep.subr.mxu0 0.0
        %548 = vmatpush1.msra.mxu0 0.0
        %549 = vmatprep.subr.mxu0 0.0
        %550 = vmatpush1.msra.mxu0 0.0
        %551 = vmatprep.subr.mxu0 0.0
        %552 = vmatpush1.msra.mxu0 0.0
        %553 = vmatprep.mubr.f32.mxu0 0.0
        %v554 = vand.u32 %v297, 4294901760
        %555 = vmatmul.mubr.f32.gmra.mrb[0].mxu0 %v554
        %v556 = vpop.f32.mrb[0].mxu0
        %v557 = vadd.f32 %v396, %v556
        %v558 = vpop.f32.mrb[0].mxu0
        %559 = vmatprep.mubr.f32.mxu0 0.0
        %v560 = vand.u32 %v300, 4294901760
        %561 = vmatmul.mubr.f32.gmra.mrb[0].mxu0 %v560
        %v562 = vpop.f32.mrb[0].mxu0
        %v563 = vadd.f32 %v406, %v562
        %v564 = vpop.f32.mrb[0].mxu0
        %565 = vmatprep.mubr.f32.mxu0 0.0
        %v566 = vand.u32 %v303, 4294901760
        %567 = vmatmul.mubr.f32.gmra.mrb[0].mxu0 %v566
        %v568 = vpop.f32.mrb[0].mxu0
        %v569 = vadd.f32 %v416, %v568
        %v570 = vpop.f32.mrb[0].mxu0
        %571 = vmatprep.mubr.f32.mxu0 0.0
        %v572 = vand.u32 %v306, 4294901760
        %573 = vmatmul.mubr.f32.gmra.mrb[0].mxu0 %v572
        %v574 = vpop.f32.mrb[0].mxu0
        %v575 = vadd.f32 %v426, %v574
        %v576 = vpop.f32.mrb[0].mxu0
        %577 = vmatprep.mubr.f32.mxu0 0.0
        %v578 = vand.u32 %v309, 4294901760
        %579 = vmatmul.mubr.f32.gmra.mrb[0].mxu0 %v578
        %v580 = vpop.f32.mrb[0].mxu0
        %v581 = vadd.f32 %v436, %v580
        %v582 = vpop.f32.mrb[0].mxu0
        %583 = vmatprep.mubr.f32.mxu0 0.0
        %v584 = vand.u32 %v312, 4294901760
        %585 = vmatmul.mubr.f32.gmra.mrb[0].mxu0 %v584
        %v586 = vpop.f32.mrb[0].mxu0
        %v587 = vadd.f32 %v446, %v586
        %v588 = vpop.f32.mrb[0].mxu0
        %589 = vmatprep.mubr.f32.mxu0 0.0
        %v590 = vand.u32 %v315, 4294901760
        %591 = vmatmul.mubr.f32.gmra.mrb[0].mxu0 %v590
        %v592 = vpop.f32.mrb[0].mxu0
        %v593 = vadd.f32 %v456, %v592
        %v594 = vpop.f32.mrb[0].mxu0
        %595 = vmatprep.mubr.f32.mxu0 0.0
        %v596 = vand.u32 %v318, 4294901760
        %597 = vmatmul.mubr.f32.gmra.mrb[0].mxu0 %v596
        %v598 = vpop.f32.mrb[0].mxu0
        %v599 = vadd.f32 %v466, %v598
        %v600 = vpop.f32.mrb[0].mxu0
        %601 = vdwg.mxu0
        %602 = vmatprep.subr.mxu0 0.0
        %v603 = vand.u32 %v284, 4294901760
        %v604 = vsub.f32 %v284, %v603
        %605 = vmatpush1.msra.mxu0 %v604
        %606 = vmatprep.subr.mxu0 0.0
        %v607 = vand.u32 %v285, 4294901760
        %v608 = vsub.f32 %v285, %v607
        %609 = vmatpush1.msra.mxu0 %v608
        %610 = vmatprep.subr.mxu0 0.0
        %v611 = vand.u32 %v286, 4294901760
        %v612 = vsub.f32 %v286, %v611
        %613 = vmatpush1.msra.mxu0 %v612
        %614 = vmatprep.subr.mxu0 0.0
        %v615 = vand.u32 %v287, 4294901760
        %v616 = vsub.f32 %v287, %v615
        %617 = vmatpush1.msra.mxu0 %v616
        %618 = vmatprep.subr.mxu0 0.0
        %619 = vmatpush1.msra.mxu0 0.0
        %620 = vmatprep.subr.mxu0 0.0
        %621 = vmatpush1.msra.mxu0 0.0
        %622 = vmatprep.subr.mxu0 0.0
        %623 = vmatpush1.msra.mxu0 0.0
        %624 = vmatprep.subr.mxu0 0.0
        %625 = vmatpush1.msra.mxu0 0.0
        %626 = vmatprep.subr.mxu0 0.0
        %627 = vmatpush1.msra.mxu0 0.0
        %628 = vmatprep.subr.mxu0 0.0
        %629 = vmatpush1.msra.mxu0 0.0
        %630 = vmatprep.subr.mxu0 0.0
        %631 = vmatpush1.msra.mxu0 0.0
        %632 = vmatprep.subr.mxu0 0.0
        %633 = vmatpush1.msra.mxu0 0.0
        %634 = vmatprep.subr.mxu0 0.0
        %635 = vmatpush1.msra.mxu0 0.0
        %636 = vmatprep.subr.mxu0 0.0
        %637 = vmatpush1.msra.mxu0 0.0
        %638 = vmatprep.subr.mxu0 0.0
        %639 = vmatpush1.msra.mxu0 0.0
        %640 = vmatprep.subr.mxu0 0.0
        %641 = vmatpush1.msra.mxu0 0.0
        %642 = vmatprep.subr.mxu0 0.0
        %643 = vmatpush1.msra.mxu0 0.0
        %644 = vmatprep.subr.mxu0 0.0
        %645 = vmatpush1.msra.mxu0 0.0
        %646 = vmatprep.subr.mxu0 0.0
        %647 = vmatpush1.msra.mxu0 0.0
        %648 = vmatprep.subr.mxu0 0.0
        %649 = vmatpush1.msra.mxu0 0.0
        %650 = vmatprep.subr.mxu0 0.0
        %651 = vmatpush1.msra.mxu0 0.0
        %652 = vmatprep.subr.mxu0 0.0
        %653 = vmatpush1.msra.mxu0 0.0
        %654 = vmatprep.subr.mxu0 0.0
        %655 = vmatpush1.msra.mxu0 0.0
        %656 = vmatprep.subr.mxu0 0.0
        %657 = vmatpush1.msra.mxu0 0.0
        %658 = vmatprep.subr.mxu0 0.0
        %659 = vmatpush1.msra.mxu0 0.0
        %660 = vmatprep.subr.mxu0 0.0
        %661 = vmatpush1.msra.mxu0 0.0
        %662 = vmatprep.subr.mxu0 0.0
        %663 = vmatpush1.msra.mxu0 0.0
        %664 = vmatprep.subr.mxu0 0.0
        %665 = vmatpush1.msra.mxu0 0.0
        %666 = vmatprep.subr.mxu0 0.0
        %667 = vmatpush1.msra.mxu0 0.0
        %668 = vmatprep.subr.mxu0 0.0
        %669 = vmatpush1.msra.mxu0 0.0
        %670 = vmatprep.subr.mxu0 0.0
        %671 = vmatpush1.msra.mxu0 0.0
        %672 = vmatprep.subr.mxu0 0.0
        %673 = vmatpush1.msra.mxu0 0.0
        %674 = vmatprep.mubr.f32.mxu0 0.0
        %v675 = vand.u32 %v297, 4294901760
        %v676 = vsub.f32 %v297, %v675
        %677 = vmatmul.mubr.f32.gmra.mrb[0].mxu0 %v676
        %v678 = vpop.f32.mrb[0].mxu0
        %v679 = vadd.f32 %v557, %v678
        %v680 = vpop.f32.mrb[0].mxu0
        %681 = vmatprep.mubr.f32.mxu0 0.0
        %v682 = vand.u32 %v300, 4294901760
        %v683 = vsub.f32 %v300, %v682
        %684 = vmatmul.mubr.f32.gmra.mrb[0].mxu0 %v683
        %v685 = vpop.f32.mrb[0].mxu0
        %v686 = vadd.f32 %v563, %v685
        %v687 = vpop.f32.mrb[0].mxu0
        %688 = vmatprep.mubr.f32.mxu0 0.0
        %v689 = vand.u32 %v303, 4294901760
        %v690 = vsub.f32 %v303, %v689
        %691 = vmatmul.mubr.f32.gmra.mrb[0].mxu0 %v690
        %v692 = vpop.f32.mrb[0].mxu0
        %v693 = vadd.f32 %v569, %v692
        %v694 = vpop.f32.mrb[0].mxu0
        %695 = vmatprep.mubr.f32.mxu0 0.0
        %v696 = vand.u32 %v306, 4294901760
        %v697 = vsub.f32 %v306, %v696
        %698 = vmatmul.mubr.f32.gmra.mrb[0].mxu0 %v697
        %v699 = vpop.f32.mrb[0].mxu0
        %v700 = vadd.f32 %v575, %v699
        %v701 = vpop.f32.mrb[0].mxu0
        %702 = vmatprep.mubr.f32.mxu0 0.0
        %v703 = vand.u32 %v309, 4294901760
        %v704 = vsub.f32 %v309, %v703
        %705 = vmatmul.mubr.f32.gmra.mrb[0].mxu0 %v704
        %v706 = vpop.f32.mrb[0].mxu0
        %v707 = vadd.f32 %v581, %v706
        %v708 = vpop.f32.mrb[0].mxu0
        %709 = vmatprep.mubr.f32.mxu0 0.0
        %v710 = vand.u32 %v312, 4294901760
        %v711 = vsub.f32 %v312, %v710
        %712 = vmatmul.mubr.f32.gmra.mrb[0].mxu0 %v711
        %v713 = vpop.f32.mrb[0].mxu0
        %v714 = vadd.f32 %v587, %v713
        %v715 = vpop.f32.mrb[0].mxu0
        %716 = vmatprep.mubr.f32.mxu0 0.0
        %v717 = vand.u32 %v315, 4294901760
        %v718 = vsub.f32 %v315, %v717
        %719 = vmatmul.mubr.f32.gmra.mrb[0].mxu0 %v718
        %v720 = vpop.f32.mrb[0].mxu0
        %v721 = vadd.f32 %v593, %v720
        %v722 = vpop.f32.mrb[0].mxu0
        %723 = vmatprep.mubr.f32.mxu0 0.0
        %v724 = vand.u32 %v318, 4294901760
        %v725 = vsub.f32 %v318, %v724
        %726 = vmatmul.mubr.f32.gmra.mrb[0].mxu0 %v725
        %v727 = vpop.f32.mrb[0].mxu0
        %v728 = vadd.f32 %v599, %v727
        %v729 = vpop.f32.mrb[0].mxu0
        %730 = vdwg.mxu0
        %731 = vmatprep.subr.mxu0 0.0
        %v732 = vand.u32 %v284, 4294901760
        %733 = vmatpush1.msra.mxu0 %v732
        %734 = vmatprep.subr.mxu0 0.0
        %v735 = vand.u32 %v285, 4294901760
        %736 = vmatpush1.msra.mxu0 %v735
        %737 = vmatprep.subr.mxu0 0.0
        %v738 = vand.u32 %v286, 4294901760
        %739 = vmatpush1.msra.mxu0 %v738
        %740 = vmatprep.subr.mxu0 0.0
        %v741 = vand.u32 %v287, 4294901760
        %742 = vmatpush1.msra.mxu0 %v741
        %743 = vmatprep.subr.mxu0 0.0
        %744 = vmatpush1.msra.mxu0 0.0
        %745 = vmatprep.subr.mxu0 0.0
        %746 = vmatpush1.msra.mxu0 0.0
        %747 = vmatprep.subr.mxu0 0.0
        %748 = vmatpush1.msra.mxu0 0.0
        %749 = vmatprep.subr.mxu0 0.0
        %750 = vmatpush1.msra.mxu0 0.0
        %751 = vmatprep.subr.mxu0 0.0
        %752 = vmatpush1.msra.mxu0 0.0
        %753 = vmatprep.subr.mxu0 0.0
        %754 = vmatpush1.msra.mxu0 0.0
        %755 = vmatprep.subr.mxu0 0.0
        %756 = vmatpush1.msra.mxu0 0.0
        %757 = vmatprep.subr.mxu0 0.0
        %758 = vmatpush1.msra.mxu0 0.0
        %759 = vmatprep.subr.mxu0 0.0
        %760 = vmatpush1.msra.mxu0 0.0
        %761 = vmatprep.subr.mxu0 0.0
        %762 = vmatpush1.msra.mxu0 0.0
        %763 = vmatprep.subr.mxu0 0.0
        %764 = vmatpush1.msra.mxu0 0.0
        %765 = vmatprep.subr.mxu0 0.0
        %766 = vmatpush1.msra.mxu0 0.0
        %767 = vmatprep.subr.mxu0 0.0
        %768 = vmatpush1.msra.mxu0 0.0
        %769 = vmatprep.subr.mxu0 0.0
        %770 = vmatpush1.msra.mxu0 0.0
        %771 = vmatprep.subr.mxu0 0.0
        %772 = vmatpush1.msra.mxu0 0.0
        %773 = vmatprep.subr.mxu0 0.0
        %774 = vmatpush1.msra.mxu0 0.0
        %775 = vmatprep.subr.mxu0 0.0
        %776 = vmatpush1.msra.mxu0 0.0
        %777 = vmatprep.subr.mxu0 0.0
        %778 = vmatpush1.msra.mxu0 0.0
        %779 = vmatprep.subr.mxu0 0.0
        %780 = vmatpush1.msra.mxu0 0.0
        %781 = vmatprep.subr.mxu0 0.0
        %782 = vmatpush1.msra.mxu0 0.0
        %783 = vmatprep.subr.mxu0 0.0
        %784 = vmatpush1.msra.mxu0 0.0
        %785 = vmatprep.subr.mxu0 0.0
        %786 = vmatpush1.msra.mxu0 0.0
        %787 = vmatprep.subr.mxu0 0.0
        %788 = vmatpush1.msra.mxu0 0.0
        %789 = vmatprep.subr.mxu0 0.0
        %790 = vmatpush1.msra.mxu0 0.0
        %791 = vmatprep.subr.mxu0 0.0
        %792 = vmatpush1.msra.mxu0 0.0
        %793 = vmatprep.subr.mxu0 0.0
        %794 = vmatpush1.msra.mxu0 0.0
        %795 = vmatprep.subr.mxu0 0.0
        %796 = vmatpush1.msra.mxu0 0.0
        %797 = vmatprep.subr.mxu0 0.0
        %798 = vmatpush1.msra.mxu0 0.0
        %799 = vmatprep.mubr.f32.mxu0 0.0
        %v800 = vand.u32 %v297, 4294901760
        %v801 = vsub.f32 %v297, %v800
        %v802 = vand.u32 %v801, 4294901760
        %803 = vmatmul.mubr.f32.gmra.mrb[0].mxu0 %v802
        %v804 = vpop.f32.mrb[0].mxu0
        %v805 = vadd.f32 %v679, %v804
        %v806 = vpop.f32.mrb[0].mxu0
        %807 = vmatprep.mubr.f32.mxu0 0.0
        %v808 = vand.u32 %v300, 4294901760
        %v809 = vsub.f32 %v300, %v808
        %v810 = vand.u32 %v809, 4294901760
        %811 = vmatmul.mubr.f32.gmra.mrb[0].mxu0 %v810
        %v812 = vpop.f32.mrb[0].mxu0
        %v813 = vadd.f32 %v686, %v812
        %v814 = vpop.f32.mrb[0].mxu0
        %815 = vmatprep.mubr.f32.mxu0 0.0
        %v816 = vand.u32 %v303, 4294901760
        %v817 = vsub.f32 %v303, %v816
        %v818 = vand.u32 %v817, 4294901760
        %819 = vmatmul.mubr.f32.gmra.mrb[0].mxu0 %v818
        %v820 = vpop.f32.mrb[0].mxu0
        %v821 = vadd.f32 %v693, %v820
        %v822 = vpop.f32.mrb[0].mxu0
        %823 = vmatprep.mubr.f32.mxu0 0.0
        %v824 = vand.u32 %v306, 4294901760
        %v825 = vsub.f32 %v306, %v824
        %v826 = vand.u32 %v825, 4294901760
        %827 = vmatmul.mubr.f32.gmra.mrb[0].mxu0 %v826
        %v828 = vpop.f32.mrb[0].mxu0
        %v829 = vadd.f32 %v700, %v828
        %v830 = vpop.f32.mrb[0].mxu0
        %831 = vmatprep.mubr.f32.mxu0 0.0
        %v832 = vand.u32 %v309, 4294901760
        %v833 = vsub.f32 %v309, %v832
        %v834 = vand.u32 %v833, 4294901760
        %835 = vmatmul.mubr.f32.gmra.mrb[0].mxu0 %v834
        %v836 = vpop.f32.mrb[0].mxu0
        %v837 = vadd.f32 %v707, %v836
        %v838 = vpop.f32.mrb[0].mxu0
        %839 = vmatprep.mubr.f32.mxu0 0.0
        %v840 = vand.u32 %v312, 4294901760
        %v841 = vsub.f32 %v312, %v840
        %v842 = vand.u32 %v841, 4294901760
        %843 = vmatmul.mubr.f32.gmra.mrb[0].mxu0 %v842
        %v844 = vpop.f32.mrb[0].mxu0
        %v845 = vadd.f32 %v714, %v844
        %v846 = vpop.f32.mrb[0].mxu0
        %847 = vmatprep.mubr.f32.mxu0 0.0
        %v848 = vand.u32 %v315, 4294901760
        %v849 = vsub.f32 %v315, %v848
        %v850 = vand.u32 %v849, 4294901760
        %851 = vmatmul.mubr.f32.gmra.mrb[0].mxu0 %v850
        %v852 = vpop.f32.mrb[0].mxu0
        %v853 = vadd.f32 %v721, %v852
        %v854 = vpop.f32.mrb[0].mxu0
        %855 = vmatprep.mubr.f32.mxu0 0.0
        %v856 = vand.u32 %v318, 4294901760
        %v857 = vsub.f32 %v318, %v856
        %v858 = vand.u32 %v857, 4294901760
        %859 = vmatmul.mubr.f32.gmra.mrb[0].mxu0 %v858
        %v860 = vpop.f32.mrb[0].mxu0
        %v861 = vadd.f32 %v728, %v860
        %v862 = vpop.f32.mrb[0].mxu0
        %863 = vdwg.mxu0
        %864 = vmatprep.subr.mxu0 0.0
        %v865 = vand.u32 %v284, 4294901760
        %v866 = vsub.f32 %v284, %v865
        %v867 = vand.u32 %v866, 4294901760
        %868 = vmatpush1.msra.mxu0 %v867
        %869 = vmatprep.subr.mxu0 0.0
        %v870 = vand.u32 %v285, 4294901760
        %v871 = vsub.f32 %v285, %v870
        %v872 = vand.u32 %v871, 4294901760
        %873 = vmatpush1.msra.mxu0 %v872
        %874 = vmatprep.subr.mxu0 0.0
        %v875 = vand.u32 %v286, 4294901760
        %v876 = vsub.f32 %v286, %v875
        %v877 = vand.u32 %v876, 4294901760
        %878 = vmatpush1.msra.mxu0 %v877
        %879 = vmatprep.subr.mxu0 0.0
        %v880 = vand.u32 %v287, 4294901760
        %v881 = vsub.f32 %v287, %v880
        %v882 = vand.u32 %v881, 4294901760
        %883 = vmatpush1.msra.mxu0 %v882
        %884 = vmatprep.subr.mxu0 0.0
        %885 = vmatpush1.msra.mxu0 0.0
        %886 = vmatprep.subr.mxu0 0.0
        %887 = vmatpush1.msra.mxu0 0.0
        %888 = vmatprep.subr.mxu0 0.0
        %889 = vmatpush1.msra.mxu0 0.0
        %890 = vmatprep.subr.mxu0 0.0
        %891 = vmatpush1.msra.mxu0 0.0
        %892 = vmatprep.subr.mxu0 0.0
        %893 = vmatpush1.msra.mxu0 0.0
        %894 = vmatprep.subr.mxu0 0.0
        %895 = vmatpush1.msra.mxu0 0.0
        %896 = vmatprep.subr.mxu0 0.0
        %897 = vmatpush1.msra.mxu0 0.0
        %898 = vmatprep.subr.mxu0 0.0
        %899 = vmatpush1.msra.mxu0 0.0
        %900 = vmatprep.subr.mxu0 0.0
        %901 = vmatpush1.msra.mxu0 0.0
        %902 = vmatprep.subr.mxu0 0.0
        %903 = vmatpush1.msra.mxu0 0.0
        %904 = vmatprep.subr.mxu0 0.0
        %905 = vmatpush1.msra.mxu0 0.0
        %906 = vmatprep.subr.mxu0 0.0
        %907 = vmatpush1.msra.mxu0 0.0
        %908 = vmatprep.subr.mxu0 0.0
        %909 = vmatpush1.msra.mxu0 0.0
        %910 = vmatprep.subr.mxu0 0.0
        %911 = vmatpush1.msra.mxu0 0.0
        %912 = vmatprep.subr.mxu0 0.0
        %913 = vmatpush1.msra.mxu0 0.0
        %914 = vmatprep.subr.mxu0 0.0
        %915 = vmatpush1.msra.mxu0 0.0
        %916 = vmatprep.subr.mxu0 0.0
        %917 = vmatpush1.msra.mxu0 0.0
        %918 = vmatprep.subr.mxu0 0.0
        %919 = vmatpush1.msra.mxu0 0.0
        %920 = vmatprep.subr.mxu0 0.0
        %921 = vmatpush1.msra.mxu0 0.0
        %922 = vmatprep.subr.mxu0 0.0
        %923 = vmatpush1.msra.mxu0 0.0
        %924 = vmatprep.subr.mxu0 0.0
        %925 = vmatpush1.msra.mxu0 0.0
        %926 = vmatprep.subr.mxu0 0.0
        %927 = vmatpush1.msra.mxu0 0.0
        %928 = vmatprep.subr.mxu0 0.0
        %929 = vmatpush1.msra.mxu0 0.0
        %930 = vmatprep.subr.mxu0 0.0
        %931 = vmatpush1.msra.mxu0 0.0
        %932 = vmatprep.subr.mxu0 0.0
        %933 = vmatpush1.msra.mxu0 0.0
        %934 = vmatprep.subr.mxu0 0.0
        %935 = vmatpush1.msra.mxu0 0.0
        %936 = vmatprep.subr.mxu0 0.0
        %937 = vmatpush1.msra.mxu0 0.0
        %938 = vmatprep.subr.mxu0 0.0
        %939 = vmatpush1.msra.mxu0 0.0
        %940 = vmatprep.mubr.f32.mxu0 0.0
        %v941 = vand.u32 %v297, 4294901760
        %942 = vmatmul.mubr.f32.gmra.mrb[0].mxu0 %v941
        %v943 = vpop.f32.mrb[0].mxu0
        %v944 = vadd.f32 %v805, %v943
        %v945 = vpop.f32.mrb[0].mxu0
        %946 = vmatprep.mubr.f32.mxu0 0.0
        %v947 = vand.u32 %v300, 4294901760
        %948 = vmatmul.mubr.f32.gmra.mrb[0].mxu0 %v947
        %v949 = vpop.f32.mrb[0].mxu0
        %v950 = vadd.f32 %v813, %v949
        %v951 = vpop.f32.mrb[0].mxu0
        %952 = vmatprep.mubr.f32.mxu0 0.0
        %v953 = vand.u32 %v303, 4294901760
        %954 = vmatmul.mubr.f32.gmra.mrb[0].mxu0 %v953
        %v955 = vpop.f32.mrb[0].mxu0
        %v956 = vadd.f32 %v821, %v955
        %v957 = vpop.f32.mrb[0].mxu0
        %958 = vmatprep.mubr.f32.mxu0 0.0
        %v959 = vand.u32 %v306, 4294901760
        %960 = vmatmul.mubr.f32.gmra.mrb[0].mxu0 %v959
        %v961 = vpop.f32.mrb[0].mxu0
        %v962 = vadd.f32 %v829, %v961
        %v963 = vpop.f32.mrb[0].mxu0
        %964 = vmatprep.mubr.f32.mxu0 0.0
        %v965 = vand.u32 %v309, 4294901760
        %966 = vmatmul.mubr.f32.gmra.mrb[0].mxu0 %v965
        %v967 = vpop.f32.mrb[0].mxu0
        %v968 = vadd.f32 %v837, %v967
        %v969 = vpop.f32.mrb[0].mxu0
        %970 = vmatprep.mubr.f32.mxu0 0.0
        %v971 = vand.u32 %v312, 4294901760
        %972 = vmatmul.mubr.f32.gmra.mrb[0].mxu0 %v971
        %v973 = vpop.f32.mrb[0].mxu0
        %v974 = vadd.f32 %v845, %v973
        %v975 = vpop.f32.mrb[0].mxu0
        %976 = vmatprep.mubr.f32.mxu0 0.0
        %v977 = vand.u32 %v315, 4294901760
        %978 = vmatmul.mubr.f32.gmra.mrb[0].mxu0 %v977
        %v979 = vpop.f32.mrb[0].mxu0
        %v980 = vadd.f32 %v853, %v979
        %v981 = vpop.f32.mrb[0].mxu0
        %982 = vmatprep.mubr.f32.mxu0 0.0
        %v983 = vand.u32 %v318, 4294901760
        %984 = vmatmul.mubr.f32.gmra.mrb[0].mxu0 %v983
        %v985 = vpop.f32.mrb[0].mxu0
        %v986 = vadd.f32 %v861, %v985
        %v987 = vpop.f32.mrb[0].mxu0
        %988 = vdwg.mxu0
        %989 = vmatprep.subr.mxu0 0.0
        %v990 = vand.u32 %v284, 4294901760
        %991 = vmatpush1.msra.mxu0 %v990
        %992 = vmatprep.subr.mxu0 0.0
        %v993 = vand.u32 %v285, 4294901760
        %994 = vmatpush1.msra.mxu0 %v993
        %995 = vmatprep.subr.mxu0 0.0
        %v996 = vand.u32 %v286, 4294901760
        %997 = vmatpush1.msra.mxu0 %v996
        %998 = vmatprep.subr.mxu0 0.0
        %v999 = vand.u32 %v287, 4294901760
        %1000 = vmatpush1.msra.mxu0 %v999
        %1001 = vmatprep.subr.mxu0 0.0
        %1002 = vmatpush1.msra.mxu0 0.0
        %1003 = vmatprep.subr.mxu0 0.0
        %1004 = vmatpush1.msra.mxu0 0.0
        %1005 = vmatprep.subr.mxu0 0.0
        %1006 = vmatpush1.msra.mxu0 0.0
        %1007 = vmatprep.subr.mxu0 0.0
        %1008 = vmatpush1.msra.mxu0 0.0
        %1009 = vmatprep.subr.mxu0 0.0
        %1010 = vmatpush1.msra.mxu0 0.0
        %1011 = vmatprep.subr.mxu0 0.0
        %1012 = vmatpush1.msra.mxu0 0.0
        %1013 = vmatprep.subr.mxu0 0.0
        %1014 = vmatpush1.msra.mxu0 0.0
        %1015 = vmatprep.subr.mxu0 0.0
        %1016 = vmatpush1.msra.mxu0 0.0
        %1017 = vmatprep.subr.mxu0 0.0
        %1018 = vmatpush1.msra.mxu0 0.0
        %1019 = vmatprep.subr.mxu0 0.0
        %1020 = vmatpush1.msra.mxu0 0.0
        %1021 = vmatprep.subr.mxu0 0.0
        %1022 = vmatpush1.msra.mxu0 0.0
        %1023 = vmatprep.subr.mxu0 0.0
        %1024 = vmatpush1.msra.mxu0 0.0
        %1025 = vmatprep.subr.mxu0 0.0
        %1026 = vmatpush1.msra.mxu0 0.0
        %1027 = vmatprep.subr.mxu0 0.0
        %1028 = vmatpush1.msra.mxu0 0.0
        %1029 = vmatprep.subr.mxu0 0.0
        %1030 = vmatpush1.msra.mxu0 0.0
        %1031 = vmatprep.subr.mxu0 0.0
        %1032 = vmatpush1.msra.mxu0 0.0
        %1033 = vmatprep.subr.mxu0 0.0
        %1034 = vmatpush1.msra.mxu0 0.0
        %1035 = vmatprep.subr.mxu0 0.0
        %1036 = vmatpush1.msra.mxu0 0.0
        %1037 = vmatprep.subr.mxu0 0.0
        %1038 = vmatpush1.msra.mxu0 0.0
        %1039 = vmatprep.subr.mxu0 0.0
        %1040 = vmatpush1.msra.mxu0 0.0
        %1041 = vmatprep.subr.mxu0 0.0
        %1042 = vmatpush1.msra.mxu0 0.0
        %1043 = vmatprep.subr.mxu0 0.0
        %1044 = vmatpush1.msra.mxu0 0.0
        %1045 = vmatprep.subr.mxu0 0.0
        %1046 = vmatpush1.msra.mxu0 0.0
        %1047 = vmatprep.subr.mxu0 0.0
        %1048 = vmatpush1.msra.mxu0 0.0
        %1049 = vmatprep.subr.mxu0 0.0
        %1050 = vmatpush1.msra.mxu0 0.0
        %1051 = vmatprep.subr.mxu0 0.0
        %1052 = vmatpush1.msra.mxu0 0.0
        %1053 = vmatprep.subr.mxu0 0.0
        %1054 = vmatpush1.msra.mxu0 0.0
        %1055 = vmatprep.subr.mxu0 0.0
        %1056 = vmatpush1.msra.mxu0 0.0
        %1057 = vmatprep.mubr.f32.mxu0 0.0
        %v1058 = vand.u32 %v297, 4294901760
        %1059 = vmatmul.mubr.f32.gmra.mrb[0].mxu0 %v1058
        %v1060 = vpop.f32.mrb[0].mxu0
        %v1061 = vadd.f32 %v944, %v1060
        %v1062 = vpop.f32.mrb[0].mxu0
        %1063 = vmatprep.mubr.f32.mxu0 0.0
        %v1064 = vand.u32 %v300, 4294901760
        %1065 = vmatmul.mubr.f32.gmra.mrb[0].mxu0 %v1064
        %v1066 = vpop.f32.mrb[0].mxu0
        %v1067 = vadd.f32 %v950, %v1066
        %v1068 = vpop.f32.mrb[0].mxu0
        %1069 = vmatprep.mubr.f32.mxu0 0.0
        %v1070 = vand.u32 %v303, 4294901760
        %1071 = vmatmul.mubr.f32.gmra.mrb[0].mxu0 %v1070
        %v1072 = vpop.f32.mrb[0].mxu0
        %v1073 = vadd.f32 %v956, %v1072
        %v1074 = vpop.f32.mrb[0].mxu0
        %1075 = vmatprep.mubr.f32.mxu0 0.0
        %v1076 = vand.u32 %v306, 4294901760
        %1077 = vmatmul.mubr.f32.gmra.mrb[0].mxu0 %v1076
        %v1078 = vpop.f32.mrb[0].mxu0
        %v1079 = vadd.f32 %v962, %v1078
        %v1080 = vpop.f32.mrb[0].mxu0
        %1081 = vmatprep.mubr.f32.mxu0 0.0
        %v1082 = vand.u32 %v309, 4294901760
        %1083 = vmatmul.mubr.f32.gmra.mrb[0].mxu0 %v1082
        %v1084 = vpop.f32.mrb[0].mxu0
        %v1085 = vadd.f32 %v968, %v1084
        %v1086 = vpop.f32.mrb[0].mxu0
        %1087 = vmatprep.mubr.f32.mxu0 0.0
        %v1088 = vand.u32 %v312, 4294901760
        %1089 = vmatmul.mubr.f32.gmra.mrb[0].mxu0 %v1088
        %v1090 = vpop.f32.mrb[0].mxu0
        %v1091 = vadd.f32 %v974, %v1090
        %v1092 = vpop.f32.mrb[0].mxu0
        %1093 = vmatprep.mubr.f32.mxu0 0.0
        %v1094 = vand.u32 %v315, 4294901760
        %1095 = vmatmul.mubr.f32.gmra.mrb[0].mxu0 %v1094
        %v1096 = vpop.f32.mrb[0].mxu0
        %v1097 = vadd.f32 %v980, %v1096
        %v1098 = vpop.f32.mrb[0].mxu0
        %1099 = vmatprep.mubr.f32.mxu0 0.0
        %v1100 = vand.u32 %v318, 4294901760
        %1101 = vmatmul.mubr.f32.gmra.mrb[0].mxu0 %v1100
        %v1102 = vpop.f32.mrb[0].mxu0
        %v1103 = vadd.f32 %v986, %v1102
        %v1104 = vpop.f32.mrb[0].mxu0
        %1105 = vdwg.mxu0
        %v1106 = vtanh.pop %v1061
        %v1107 = vtanh.pop %v1067
        %v1108 = vtanh.pop %v1073
        %v1109 = vtanh.pop %v1079
        %v1110 = vtanh.pop %v1085
        %v1111 = vtanh.pop %v1091
        %v1112 = vtanh.pop %v1097
        %v1113 = vtanh.pop %v1103
        %v1114 = vld [vmem:[%s4] sm:$0x1]
        %v1116 = vlaneseq
        %v1117 = vshrl.u32 %v1116, 7
        %v1118 = vsub.s32 0, %v1117
        %v1119 = vrot.slane %v1114, %v1118
        %v1121 = vmul.f32 %v1106, %v1119
        %v1122 = vmul.f32 %v1107, %v1119
        %v1123 = vmul.f32 %v1108, %v1119
        %v1124 = vmul.f32 %v1109, %v1119
        %v1125 = vmul.f32 %v1110, %v1119
        %v1126 = vmul.f32 %v1111, %v1119
        %v1127 = vmul.f32 %v1112, %v1119
        %v1128 = vmul.f32 %v1113, %v1119
        %v1129 = vsel %vm295, %v1121, 0.0
        %1130 = vadd.xlane.f32.xlu0 %v1129
        %v1131 = vpop.xlane.xlu0 %1130
        %v1132 = vsel %vm295, %v1122, 0.0
        %1133 = vadd.xlane.f32.xlu0 %v1132
        %v1134 = vpop.xlane.xlu0 %1133
        %v1135 = vsel %vm295, %v1123, 0.0
        %1136 = vadd.xlane.f32.xlu0 %v1135
        %v1137 = vpop.xlane.xlu0 %1136
        %v1138 = vsel %vm295, %v1124, 0.0
        %1139 = vadd.xlane.f32.xlu0 %v1138
        %v1140 = vpop.xlane.xlu0 %1139
        %v1141 = vsel %vm295, %v1125, 0.0
        %1142 = vadd.xlane.f32.xlu0 %v1141
        %v1143 = vpop.xlane.xlu0 %1142
        %v1144 = vsel %vm295, %v1126, 0.0
        %1145 = vadd.xlane.f32.xlu0 %v1144
        %v1146 = vpop.xlane.xlu0 %1145
        %v1147 = vsel %vm295, %v1127, 0.0
        %1148 = vadd.xlane.f32.xlu0 %v1147
        %v1149 = vpop.xlane.xlu0 %1148
        %v1150 = vsel %vm295, %v1128, 0.0
        %1151 = vadd.xlane.f32.xlu0 %v1150
        %v1152 = vpop.xlane.xlu0 %1151
        %v1153 = vld [vmem:[%s275] sm:$0xff]
        %vm1154 = vcmp.lt.f32.partialorder %v1153, 0.5
        %v1163 = vlaneseq
        %v1164 = vand.u32 %v1163, 127
        %v1165 = vlaneseq
        %v1166 = vshrl.u32 %v1165, 7
        %v1167 = vsub.s32 %v1164, %v1166
        %v1168 = vrot.slane %v1131, %v1167
        %v1169 = vlaneseq
        %v1170 = vshrl.u32 %v1169, 7
        %v1171 = vsub.s32 %v1164, %v1170
        %v1172 = vrot.slane %v1134, %v1171
        %v1173 = vlaneseq
        %v1174 = vshrl.u32 %v1173, 7
        %v1175 = vsub.s32 %v1164, %v1174
        %v1176 = vrot.slane %v1137, %v1175
        %v1177 = vlaneseq
        %v1178 = vshrl.u32 %v1177, 7
        %v1179 = vsub.s32 %v1164, %v1178
        %v1180 = vrot.slane %v1140, %v1179
        %v1181 = vlaneseq
        %v1182 = vshrl.u32 %v1181, 7
        %v1183 = vsub.s32 %v1164, %v1182
        %v1184 = vrot.slane %v1143, %v1183
        %v1185 = vlaneseq
        %v1186 = vshrl.u32 %v1185, 7
        %v1187 = vsub.s32 %v1164, %v1186
        %v1188 = vrot.slane %v1146, %v1187
        %v1189 = vlaneseq
        %v1190 = vshrl.u32 %v1189, 7
        %v1191 = vsub.s32 %v1164, %v1190
        %v1192 = vrot.slane %v1149, %v1191
        %v1193 = vlaneseq
        %v1194 = vshrl.u32 %v1193, 7
        %v1195 = vsub.s32 %v1164, %v1194
        %v1196 = vrot.slane %v1152, %v1195
        %vm1197 = vcmask 1041409
        %v1198 = vsel %vm1197, %v1172, %v1168
        %vm1199 = vcmask 1042434
        %v1200 = vsel %vm1199, %v1176, %v1198
        %vm1201 = vcmask 1043459
        %v1202 = vsel %vm1201, %v1180, %v1200
        %vm1203 = vcmask 1044484
        %v1204 = vsel %vm1203, %v1184, %v1202
        %vm1205 = vcmask 1045509
        %v1206 = vsel %vm1205, %v1188, %v1204
        %vm1207 = vcmask 1046534
        %v1208 = vsel %vm1207, %v1192, %v1206
        %vm1209 = vcmask 1047559
        %v1210 = vsel %vm1209, %v1196, %v1208
        %v1212 = vsel %vm1154, -1e+09, %v1210
        %vm1213 = vcmask 64512
        %v1214 = vsel %vm1213, %v1212, -inf
        %1215 = vmax.xlane.f32.xlu0 %v1214
        %v1216 = vpop.xlane.xlu0 %1215
        %v1217 = vsub.f32 %v1212, %v1216
        %v1218 = vmul.f32 %v1217, 1.442695
        %v1219 = vpow.pop %v1218
        %v1220 = vsel %vm1213, %v1219, 0.0
        %1221 = vadd.xlane.f32.xlu0 %v1220
        %v1222 = vpop.xlane.xlu0 %1221
        %v1223 = vrcp.pop %v1222
        %v1224 = vmul.f32 %v1219, %v1223
        %v1225 = vlaneseq
        %v1226 = vshrl.u32 %v1225, 7
        %v1227 = vsub.s32 0, %v1226
        %v1228 = vrot.slane %v1224, %v1227
        %1230 = vbcast.lane.b32.xlu0 %v1228, 256
        %v1231 = vpop.permute.xlu0 %1230
        %v1232 = vlaneseq
        %v1233 = vshrl.u32 %v1232, 7
        %v1234 = vsub.s32 1, %v1233
        %v1235 = vrot.slane %v1224, %v1234
        %1237 = vbcast.lane.b32.xlu0 %v1235, 256
        %v1238 = vpop.permute.xlu0 %1237
        %v1239 = vlaneseq
        %v1240 = vshrl.u32 %v1239, 7
        %v1241 = vsub.s32 2, %v1240
        %v1242 = vrot.slane %v1224, %v1241
        %1244 = vbcast.lane.b32.xlu0 %v1242, 256
        %v1245 = vpop.permute.xlu0 %1244
        %v1246 = vlaneseq
        %v1247 = vshrl.u32 %v1246, 7
        %v1248 = vsub.s32 3, %v1247
        %v1249 = vrot.slane %v1224, %v1248
        %1251 = vbcast.lane.b32.xlu0 %v1249, 256
        %v1252 = vpop.permute.xlu0 %1251
        %v1253 = vlaneseq
        %v1254 = vshrl.u32 %v1253, 7
        %v1255 = vsub.s32 4, %v1254
        %v1256 = vrot.slane %v1224, %v1255
        %1258 = vbcast.lane.b32.xlu0 %v1256, 256
        %v1259 = vpop.permute.xlu0 %1258
        %v1260 = vlaneseq
        %v1261 = vshrl.u32 %v1260, 7
        %v1262 = vsub.s32 5, %v1261
        %v1263 = vrot.slane %v1224, %v1262
        %1265 = vbcast.lane.b32.xlu0 %v1263, 256
        %v1266 = vpop.permute.xlu0 %1265
        %v1267 = vlaneseq
        %v1268 = vshrl.u32 %v1267, 7
        %v1269 = vsub.s32 6, %v1268
        %v1270 = vrot.slane %v1224, %v1269
        %1272 = vbcast.lane.b32.xlu0 %v1270, 256
        %v1273 = vpop.permute.xlu0 %1272
        %v1274 = vlaneseq
        %v1275 = vshrl.u32 %v1274, 7
        %v1276 = vsub.s32 7, %v1275
        %v1277 = vrot.slane %v1224, %v1276
        %1279 = vbcast.lane.b32.xlu0 %v1277, 256
        %v1280 = vpop.permute.xlu0 %1279
        %v1281 = vmul.f32 %v276, %v1231
        %v1282 = vmul.f32 %v277, %v1238
        %v1283 = vmul.f32 %v278, %v1245
        %v1284 = vmul.f32 %v279, %v1252
        %v1285 = vmul.f32 %v280, %v1259
        %v1286 = vmul.f32 %v281, %v1266
        %v1287 = vmul.f32 %v282, %v1273
        %v1288 = vmul.f32 %v283, %v1280
        %v1289 = vsel %vm295, %v1281, 0.0
        %v1290 = vrot.slane %v1289, 4
        %v1291 = vadd.f32 %v1289, %v1290
        %v1292 = vrot.slane %v1291, 2
        %v1293 = vadd.f32 %v1291, %v1292
        %v1294 = vrot.slane %v1293, 1
        %v1295 = vadd.f32 %v1293, %v1294
        %v1296 = vsel %vm295, %v1282, 0.0
        %v1297 = vrot.slane %v1296, 4
        %v1298 = vadd.f32 %v1296, %v1297
        %v1299 = vrot.slane %v1298, 2
        %v1300 = vadd.f32 %v1298, %v1299
        %v1301 = vrot.slane %v1300, 1
        %v1302 = vadd.f32 %v1300, %v1301
        %v1303 = vsel %vm295, %v1283, 0.0
        %v1304 = vrot.slane %v1303, 4
        %v1305 = vadd.f32 %v1303, %v1304
        %v1306 = vrot.slane %v1305, 2
        %v1307 = vadd.f32 %v1305, %v1306
        %v1308 = vrot.slane %v1307, 1
        %v1309 = vadd.f32 %v1307, %v1308
        %v1310 = vsel %vm295, %v1284, 0.0
        %v1311 = vrot.slane %v1310, 4
        %v1312 = vadd.f32 %v1310, %v1311
        %v1313 = vrot.slane %v1312, 2
        %v1314 = vadd.f32 %v1312, %v1313
        %v1315 = vrot.slane %v1314, 1
        %v1316 = vadd.f32 %v1314, %v1315
        %v1317 = vsel %vm295, %v1285, 0.0
        %v1318 = vrot.slane %v1317, 4
        %v1319 = vadd.f32 %v1317, %v1318
        %v1320 = vrot.slane %v1319, 2
        %v1321 = vadd.f32 %v1319, %v1320
        %v1322 = vrot.slane %v1321, 1
        %v1323 = vadd.f32 %v1321, %v1322
        %v1324 = vsel %vm295, %v1286, 0.0
        %v1325 = vrot.slane %v1324, 4
        %v1326 = vadd.f32 %v1324, %v1325
        %v1327 = vrot.slane %v1326, 2
        %v1328 = vadd.f32 %v1326, %v1327
        %v1329 = vrot.slane %v1328, 1
        %v1330 = vadd.f32 %v1328, %v1329
        %v1331 = vsel %vm295, %v1287, 0.0
        %v1332 = vrot.slane %v1331, 4
        %v1333 = vadd.f32 %v1331, %v1332
        %v1334 = vrot.slane %v1333, 2
        %v1335 = vadd.f32 %v1333, %v1334
        %v1336 = vrot.slane %v1335, 1
        %v1337 = vadd.f32 %v1335, %v1336
        %v1338 = vsel %vm295, %v1288, 0.0
        %v1339 = vrot.slane %v1338, 4
        %v1340 = vadd.f32 %v1338, %v1339
        %v1341 = vrot.slane %v1340, 2
        %v1342 = vadd.f32 %v1340, %v1341
        %v1343 = vrot.slane %v1342, 1
        %v1344 = vadd.f32 %v1342, %v1343
        %v1353 = vsel %vm1197, %v1302, %v1295
        %v1354 = vsel %vm1199, %v1309, %v1353
        %v1355 = vsel %vm1201, %v1316, %v1354
        %v1356 = vsel %vm1203, %v1323, %v1355
        %v1357 = vsel %vm1205, %v1330, %v1356
        %v1358 = vsel %vm1207, %v1337, %v1357
        %v1359 = vsel %vm1209, %v1344, %v1358
        %1361 = vst.msk [vmem:[%s270] sm:$0xff] %vm295, %v1359
        %s1362 = sand.u32 %s146, 1
        %s1363 = scalar_lea.sflag [#allocation4], %s1362
        %s1364 = sand.u32 %s146, 1
        %s1365 = smul.addr %s1364, 8
        %s1366 = scalar_lea.vmem [#allocation7], %s1365
        // Predicated region
        $region49: #{tpu_custom_call.1} parent=39 // pred_check
          %p1367 = pneg %p156
        $region50: #{tpu_custom_call.1} parent=39 // pred_check_branch
          %1369 = sbr.rel (%p1367) target = $region52
        $region51: #{tpu_custom_call.1} parent=39 // pred_region
          %s1371 = ssub.s32 128, 128
          %1372 = vsyncadd %s1363, %s1371
          %s1373 = smul.addr %s23, 128
          %s1374 = scalar_lea.hbm %s5, %s1373
          %s1376 = sshll.u32 %s1366, 4
          %s1377 = int_to_ptr.vmem [resolvable:$true] %s1376
          %1379 = dma.vmem_to_hbm [thread:$0]  %s1377, 128, %s1374, %s1363
        $region52: #{tpu_custom_call.1} parent=39 // pred_fallthru
          _
      $region40: #{tpu_custom_call.1} parent=5 // pred_fallthru
        _
      %p1380 = scmp.le.s32.totalorder 2, %s18
      // Predicated region
      $region53: #{tpu_custom_call.1} parent=5 // pred_check
        %p1381 = pneg %p1380
      $region54: #{tpu_custom_call.1} parent=5 // pred_check_branch
        %1383 = sbr.rel (%p1381) target = $region56
      $region55: #{tpu_custom_call.1} parent=5 // pred_region
        %s1384 = ssub.s32 %s18, 2
        // Predicated region
        $region57: #{tpu_custom_call.1} parent=55 // pred_check
          %p1385 = pneg %p162
        $region58: #{tpu_custom_call.1} parent=55 // pred_check_branch
          %1387 = sbr.rel (%p1385) target = $region60
        $region59: #{tpu_custom_call.1} parent=55 // pred_region
          %s1388 = sand.u32 %s147, 1
          %s1389 = scalar_lea.sflag [#allocation4], %s1388
          %s1390 = sand.u32 %s147, 1
          %s1391 = smul.addr %s1390, 8
          %s1392 = scalar_lea.vmem [#allocation7], %s1391
          %1393 = dma.done %s1389, 128
        $region60: #{tpu_custom_call.1} parent=55 // pred_fallthru
          _
      $region56: #{tpu_custom_call.1} parent=5 // pred_fallthru
        _
    $region6: #{tpu_custom_call.1} parent=1 // loop_footer
      %s22 = sadd.s32 1, %s18
    $region7: #{tpu_custom_call.1} parent=1 // loop_footer_branch
      %17 = sbr.rel target = $region3
    $region8: #{tpu_custom_call.1} parent=1 // loop_exit
      _
    %1394 = vsyncpa [#allocation3], 1
    %s1395 = scalar_lea.sflag [#allocation3], 1
    %1396 = vsyncpa %s1395, 1
    %1397 = vsyncpa [#allocation6], 1
    %1398 = vsyncpa [#allocation4], 1
    %s1399 = scalar_lea.sflag [#allocation4], 1
    %1400 = vsyncpa %s1399, 1

</llo_original>
